<compile_context>
chip_gen: v6e
topology: v6e:2x2x1
jax: 0.10.0
libtpu: 0.0.40
codegen_flags: <defaults>
</compile_context>

<pallas_src>
import functools

import jax
import jax.numpy as jnp
from jax.experimental import pallas as pl
from jax.experimental.pallas import tpu as pltpu

BN_EPS = 1e-5
MARGIN = 1.0
_MIB = 1024 * 1024


def _vmem_cap_bytes():
    """Per-core VMEM capacity; conservative (v7x) fallback if the query fails."""
    try:
        info = pltpu.get_tpu_info()
        cap = getattr(info, "vmem_capacity_bytes", None)
        if cap:
            return int(cap)
    except Exception:
        pass
    return 64 * _MIB


def _pick_lane_width(hw_tile):
    """Lane width of the per-channel partial-sum scratch."""
    if hw_tile % 128 == 0:
        return 128
    if hw_tile <= 128:
        return hw_tile
    return 1  # odd large extents (e.g. 3136): single cross-lane reduce per tile


def _stage_footprint(cs, ct, hw_tile, n, bytes_s, bytes_t, with_pool):
    """Rough per-grid-step VMEM footprint (double-buffered streams + resident
    weight + scratch + pass-1 f32 temporaries)."""
    w = max(_pick_lane_width(hw_tile), 128)        # lane padding of scratch
    fp = 2 * cs * hw_tile * bytes_s                # xs block, double buffered
    fp += 2 * ct * hw_tile * bytes_t               # xt block, double buffered
    fp += ct * cs * 2                              # bf16 1x1 weight, one copy
    fp += 2 * ct * w * 4 + ct * 128 * 4            # acc_a/acc_b + mean,1/std
    fp += 6 * ct * hw_tile * 4                     # y, s, masks, l2 temporaries
    fp += 2 * cs * hw_tile * 4                     # cast / relu temporaries
    if with_pool:
        fp += cs * w * 4 + cs * max(n, 128) * 4    # pacc + resident pool output
    return fp


def _pick_hw_tile(hw, cs, ct, n, bytes_s, bytes_t, with_pool, budget):
    if hw % 128 != 0:
        # Lane blocks must be a multiple of 128 or the full extent, so odd
        # spatial sizes (ResNet's 3136/784/196/49) cannot be tiled; they are
        # streamed as one block per (pass, sample).
        # TODO(synk): pad H*W to a multiple of 128 at the producer if untiled
        # maps ever exceed the VMEM budget.
        return hw
    tile = hw
    while (tile % 256 == 0 and
           _stage_footprint(cs, ct, tile, n, bytes_s, bytes_t, with_pool)
           > budget):
        tile //= 2
    return tile


def _lane_partial(x, width):
    """Sum (C, T) -> (C, width) using lane-aligned vreg adds only; the final
    cross-lane reduction is deferred to the caller (prologue / epilogue)."""
    t = x.shape[1]
    if t == width:
        return x
    if width == 1:
        return jnp.sum(x, axis=1, keepdims=True)
    acc = x[:, 0:width]
    for j in range(1, t // width):
        acc = acc + x[:, j * width:(j + 1) * width]
    return acc


# ---------------------------------------------------------------------------
# Stage kernel: Connect_i = Conv1x1 (no bias) + BatchNorm2d (training stats,
# weight=1, bias=0), then two reductions against the teacher feature map:
#   - sign mismatch count  ((s > 0) ^ (t > 0)).sum()
#   - criterion_active_L2(s, t, margin=1).sum()
# Optionally fuses the global average pool of relu(xs) (stage 4 only).
# Grid = (pass, sample, hw_tile); pass 0 = BN stats, pass 1 = losses.
# ---------------------------------------------------------------------------
def _stage_kernel(xs_ref, w_ref, xt_ref, *rest,
                  inv_m, inv_hw, lane_w, compute_pool):
    if compute_pool:
        out_ref, pool_ref, acc_a, acc_b, stat, pacc = rest
    else:
        out_ref, acc_a, acc_b, stat = rest
        pool_ref = pacc = None

    p = pl.program_id(0)            # 0: BN-stats pass, 1: normalize + losses
    b = pl.program_id(1)            # batch sample
    t = pl.program_id(2)            # H*W tile
    last_b = pl.num_programs(1) - 1
    last_t = pl.num_programs(2) - 1

    xs = xs_ref[...]                                        # (Cs, hw_tile)
    # 1x1 conv == channel matmul on the MXU (bf16 operands, f32 accumulate).
    y = jnp.dot(w_ref[...], xs.astype(jnp.bfloat16),
                preferred_element_type=jnp.float32)         # (Ct, hw_tile) f32

    # ---- init on the very first grid step ----
    @pl.when((p == 0) & (b == 0) & (t == 0))
    def _():
        acc_a[...] = jnp.zeros_like(acc_a)
        acc_b[...] = jnp.zeros_like(acc_b)
        if compute_pool:
            pool_ref[...] = jnp.zeros_like(pool_ref)

    # ---- pass 0: BN stats as lane-dense partials (+ fused relu avg-pool) ----
    @pl.when(p == 0)
    def _():
        acc_a[...] += _lane_partial(y, lane_w)               # sum(y)
        acc_b[...] += _lane_partial(y * y, lane_w)           # sum(y^2)
        if compute_pool:
            @pl.when(t == 0)
            def _():
                pacc[...] = jnp.zeros_like(pacc)
            pacc[...] += _lane_partial(
                jnp.maximum(xs.astype(jnp.float32), 0.0), lane_w)

            @pl.when(t == last_t)
            def _():
                # one column merge per sample (not per tile)
                col = jnp.sum(pacc[...], axis=1, keepdims=True) * inv_hw
                ids = jax.lax.broadcasted_iota(jnp.int32, pool_ref.shape, 1)
                pool_ref[...] += col * (ids == b).astype(jnp.float32)

    # ---- pass 1 prologue: finalize BN stats, reuse acc buffers for losses ----
    @pl.when((p == 1) & (b == 0) & (t == 0))
    def _():
        mean = jnp.sum(acc_a[...], axis=1, keepdims=True) * inv_m
        # TODO(synk): E[y^2]-E[y]^2 in f32 can cancel if |mean| >> std; clamped
        # to >= 0, matches PyTorch to normal tolerances.
        var = jnp.maximum(
            jnp.sum(acc_b[...], axis=1, keepdims=True) * inv_m - mean * mean,
            0.0)
        stat[:, 0:1] = mean
        stat[:, 1:2] = jax.lax.rsqrt(var + BN_EPS)
        acc_a[...] = jnp.zeros_like(acc_a)                   # -> mismatch acc
        acc_b[...] = jnp.zeros_like(acc_b)                   # -> L2 acc

    # ---- pass 1: normalize, sign-mismatch + active-L2 lane-dense partials ----
    @pl.when(p == 1)
    def _():
        st = stat[...]
        s = (y - st[:, 0:1]) * st[:, 1:2]                    # BN(w=1, b=0)
        tpos = xt_ref[...] > 0
        spos = s > 0.0
        mis = (spos != tpos).astype(jnp.float32)
        l2 = ((s + MARGIN) ** 2
              * ((s > -MARGIN) & jnp.logical_not(tpos)).astype(jnp.float32)
              + (s - MARGIN) ** 2
              * ((s <= MARGIN) & tpos).astype(jnp.float32))
        acc_a[...] += _lane_partial(mis, lane_w)
        acc_b[...] += _lane_partial(l2, lane_w)

    # ---- epilogue: reduce partials to the two output scalars ----
    @pl.when((p == 1) & (b == last_b) & (t == last_t))
    def _():
        out_ref[0, 0] = jnp.sum(acc_a[...])
        out_ref[0, 1] = jnp.sum(acc_b[...])


def connect_stage(xs, w, xt, *, with_pool):
    """xs: (N, Cs, HW) student map (NCHW, spatial flattened; f32 or bf16),
       w : (Ct, Cs)    bf16 1x1-conv weight (PyTorch (out,in) layout),
       xt: (N, Ct, HW) teacher map (f32 or bf16).
       Returns a (1,2) f32 [sign-mismatch count, active-L2 sum] and, when
       with_pool, a (Cs, N) f32 global-average-pool of relu(xs)."""
    n, cs, hw = xs.shape
    ct = w.shape[0]

    cap = _vmem_cap_bytes()
    budget = min(int(cap * 0.45), 48 * _MIB)
    hw_tile = _pick_hw_tile(hw, cs, ct, n, xs.dtype.itemsize,
                            xt.dtype.itemsize, with_pool, budget)
    assert hw % hw_tile == 0
    lane_w = _pick_lane_width(hw_tile)
    fp = _stage_footprint(cs, ct, hw_tile, n, xs.dtype.itemsize,
                          xt.dtype.itemsize, with_pool)
    vmem_limit = min(max(int(fp * 1.3), 32 * _MIB), int(cap * 0.75))

    grid = (2, n, hw // hw_tile)
    kernel = functools.partial(
        _stage_kernel, inv_m=1.0 / float(n * hw), inv_hw=1.0 / float(hw),
        lane_w=lane_w, compute_pool=with_pool)

    in_specs = [
        # student tile: same block in both passes
        pl.BlockSpec((None, cs, hw_tile), lambda p, b, t: (b, 0, t)),
        # 1x1 conv weight: whole array resident in VMEM for the entire grid
        # (single copy -> no dead second pipeline buffer).
        pl.BlockSpec(memory_space=pltpu.MemorySpace.VMEM),
        # teacher tile: only consumed in pass 1; pass 0 pins block (0,0,0) so
        # its DMA is skipped after the first step.
        pl.BlockSpec((None, ct, hw_tile), lambda p, b, t: (b * p, 0, t * p)),
    ]
    out_shape = [jax.ShapeDtypeStruct((1, 2), jnp.float32)]
    out_specs = [pl.BlockSpec((1, 2), lambda p, b, t: (0, 0),
                              memory_space=pltpu.MemorySpace.SMEM)]
    scratch_shapes = [
        pltpu.VMEM((ct, lane_w), jnp.float32),   # pass0: sum(y)  / pass1: mism
        pltpu.VMEM((ct, lane_w), jnp.float32),   # pass0: sum(y^2)/ pass1: L2
        pltpu.VMEM((ct, 2), jnp.float32),        # mean, 1/std
    ]
    if with_pool:
        out_shape.append(jax.ShapeDtypeStruct((cs, n), jnp.float32))
        out_specs.append(pl.BlockSpec((cs, n), lambda p, b, t: (0, 0)))
        scratch_shapes.append(pltpu.VMEM((cs, lane_w), jnp.float32))

    return pl.pallas_call(
        kernel,
        grid=grid,
        in_specs=in_specs,
        out_shape=out_shape if with_pool else out_shape[0],
        out_specs=out_specs if with_pool else out_specs[0],
        scratch_shapes=scratch_shapes,
        compiler_params=pltpu.CompilerParams(
            # BN statistics couple every (pass, sample, tile): all axes are
            # sequential.  A Ct-split "parallel" axis for v7x megacore was
            # considered (review) but rejected: the stage kernels are HBM-bound
            # and the split would re-read the full student map on both cores,
            # raising chip-level HBM traffic ~1.5x for no net gain.
            dimension_semantics=("arbitrary", "arbitrary", "arbitrary"),
            vmem_limit_bytes=vmem_limit),
    )(xs, w, xt)


# ---------------------------------------------------------------------------
# Head kernel: Connectfc (Linear) + s_net.fc (Linear), cross-entropy sum,
# DTL loss and exact correct-prediction count.  Small operands -> single
# block, f32 matmuls for fidelity with the PyTorch reference.
# ---------------------------------------------------------------------------
def _head_kernel(pooled_ref, wc_ref, bc_ref, ws_ref, bs_ref, out_t_ref, tgt_ref,
                 out_ref):
    pooled = pooled_ref[...]
    out_im = jnp.dot(pooled, wc_ref[...],
                     preferred_element_type=jnp.float32) + bc_ref[...]
    out_s = jnp.dot(pooled, ws_ref[...],
                    preferred_element_type=jnp.float32) + bs_ref[...]

    n, ks = out_s.shape
    tgt = tgt_ref[...]                                           # (N, 1) int32
    cls = jax.lax.broadcasted_iota(jnp.int32, (n, ks), 1)
    onehot = (cls == tgt).astype(jnp.float32)

    # CrossEntropyLoss(size_average=False): sum_b (logsumexp - logit[target])
    m = jnp.max(out_s, axis=1, keepdims=True)
    lse = m + jnp.log(jnp.sum(jnp.exp(out_s - m), axis=1, keepdims=True))
    tgt_logit = jnp.sum(onehot * out_s, axis=1, keepdims=True)
    ce_sum = jnp.sum(lse - tgt_logit)

    # DTL: mean((center(out_t) - center(out_imagenet))^2) * 10
    out_t = out_t_ref[...]
    c_t = out_t - jnp.mean(out_t, axis=1, keepdims=True)
    c_s = out_im - jnp.mean(out_im, axis=1, keepdims=True)
    dtl = jnp.mean((c_t - c_s) ** 2) * 10.0

    # exact torch.max semantics: first index attaining the row max
    pred = jnp.min(jnp.where(out_s >= m, cls, ks), axis=1, keepdims=True)
    correct = jnp.sum((pred == tgt).astype(jnp.float32))

    out_ref[0] = ce_sum
    out_ref[1] = dtl
    out_ref[2] = correct


def head(pooled, wc, bc, ws, bs, out_t, targets):
    tgt = targets.astype(jnp.int32).reshape(-1, 1)
    return pl.pallas_call(
        _head_kernel,
        out_shape=jax.ShapeDtypeStruct((3,), jnp.float32),
        in_specs=[pl.BlockSpec(memory_space=pltpu.MemorySpace.VMEM)] * 7,
        out_specs=pl.BlockSpec(memory_space=pltpu.MemorySpace.SMEM),
    )(pooled, wc, bc, ws, bs, out_t, tgt)


# ---------------------------------------------------------------------------
# Glue
# ---------------------------------------------------------------------------
def ab_distill_forward(params, res_s, res_t, out_t, targets, batch_size,
                       loss_multiplier=1.0, DTL=True, stage1=True):
    mism, l2sums = [], []
    pooled_cn = None
    for i in range(4):
        xs = res_s[i]
        xt = res_t[i]
        n, cs, hh, ww = xs.shape
        ct = xt.shape[1]
        xs3 = xs.reshape(n, cs, hh * ww)          # free reshape of NCHW
        xt3 = xt.reshape(n, ct, hh * ww)
        w = params[f"w{i + 1}"].astype(jnp.bfloat16)   # (Ct, Cs)
        outs = connect_stage(xs3, w, xt3, with_pool=(i == 3))
        if i == 3:
            scal, pooled_cn = outs
        else:
            scal = outs
        mism.append(scal[0, 0])
        l2sums.append(scal[0, 1])

    # global avg pool of relu(res4_s), fused into the stage-4 kernel; the
    # (Cs, N) -> (N, Cs) transpose of this tiny array is left to XLA.
    pooled = pooled_cn.T

    h = head(pooled, params["wc"], params["bc"], params["ws"], params["bs"],
             out_t, targets)

    B = float(batch_size)
    loss_AT = [mism[i] / float(res_t[i].size) for i in range(4)]
    if stage1:
        loss = (l2sums[3] / B + l2sums[2] / B / 2.0 + l2sums[1] / B / 4.0
                + l2sums[0] / B / 8.0) / 1000.0
    else:
        loss = jnp.float32(0.0)
    loss = loss * loss_multiplier

    loss_CE = h[0] / B
    loss_DTL = h[1] if DTL else jnp.float32(0.0)
    correct = h[2]

    return jnp.stack([loss, loss_CE, loss_DTL,
                      loss_AT[3], loss_AT[2], loss_AT[1], loss_AT[0],
                      correct]).reshape(1, 8)


if __name__ == "__main__":
    key = jax.random.PRNGKey(0)
    keys = jax.random.split(key, 20)

    B = 2
    loss_multiplier = 1.0
    # (student_C, teacher_C, spatial) per stage — small-scale analogue of
    # (128,256,56) (256,512,28) (512,1024,14) (1024,2048,7)
    stage_cfg = [(16, 32, 16), (32, 64, 8), (64, 128, 4), (128, 256, 2)]
    NUM_CLASSES_T = 16   # stand-in for 1000 (teacher classes / Connectfc out)
    NUM_CLASSES_S = 16   # stand-in for s_net.fc output classes

    # Connect1..4 conv weights in PyTorch layout (out, in): normal(0, sqrt(2/out))
    params = {}
    for i, (cs, ct, hw) in enumerate(stage_cfg):
        params[f"w{i + 1}"] = (jax.random.normal(keys[i], (ct, cs), jnp.float32)
                               * (2.0 / ct) ** 0.5)
    cin_fc = stage_cfg[-1][0]
    bound = 1.0 / (cin_fc ** 0.5)
    params["wc"] = jax.random.uniform(keys[4], (cin_fc, NUM_CLASSES_T),
                                      jnp.float32, -bound, bound)
    params["bc"] = jax.random.uniform(keys[5], (1, NUM_CLASSES_T),
                                      jnp.float32, -bound, bound)
    params["ws"] = jax.random.uniform(keys[6], (cin_fc, NUM_CLASSES_S),
                                      jnp.float32, -bound, bound)
    params["bs"] = jax.random.uniform(keys[7], (1, NUM_CLASSES_S),
                                      jnp.float32, -bound, bound)

    # Synthetic backbone features (NCHW, as t_net / s_net would produce).
    res_s, res_t = [], []
    for i, (cs, ct, hw) in enumerate(stage_cfg):
        res_s.append(jax.random.normal(keys[8 + i], (B, cs, hw, hw), jnp.float32))
        res_t.append(jax.random.normal(keys[12 + i], (B, ct, hw, hw), jnp.float32))
    out_t = jax.random.normal(keys[16], (B, NUM_CLASSES_T), jnp.float32)
    targets = jax.random.randint(keys[17], (B,), 0, NUM_CLASSES_S)

    result = ab_distill_forward(params, res_s, res_t, out_t, targets, B,
                                loss_multiplier=loss_multiplier,
                                DTL=True, stage1=True)
    result = jax.block_until_ready(result)
    assert result.shape == (1, 8) and result.dtype == jnp.float32
    print("KERNEL_OK")
</pallas_src>

<mosaic_0001>
module attributes {stable_mosaic.version = 11 : i64} {
  func.func @_stage_kernel(%arg0: i32, %arg1: i32, %arg2: i32, %arg3: memref<1x16x256xf32, #tpu.memory_space<vmem>>, %arg4: memref<32x16xbf16, #tpu.memory_space<vmem>>, %arg5: memref<1x32x256xf32, #tpu.memory_space<vmem>>, %arg6: memref<1x2xf32, #tpu.memory_space<smem>>, %arg7: memref<32x128xf32, #tpu.memory_space<vmem>>, %arg8: memref<32x128xf32, #tpu.memory_space<vmem>>, %arg9: memref<32x2xf32, #tpu.memory_space<vmem>>) attributes {dimension_semantics = [#tpu.dimension_semantics<arbitrary>, #tpu.dimension_semantics<arbitrary>, #tpu.dimension_semantics<arbitrary>], iteration_bounds = array<i64: 2, 2, 1>, scalar_prefetch = 0 : i64, scratch_operands = 3 : i64, tpu.core_type = #tpu.core_type<tc>, window_params = [{transform_indices = @transform_0, window_bounds = array<i64: 1, 16, 256>}, {pipeline_mode = #tpu.pipeline_mode<synchronous>, transform_indices = @transform_1, window_bounds = array<i64: 32, 16>}, {transform_indices = @transform_2, window_bounds = array<i64: 1, 32, 256>}, {transform_indices = @transform_3, window_bounds = array<i64: 1, 2>}]} {
    %c0 = arith.constant 0 : index
    %c0_0 = arith.constant 0 : index
    %c0_1 = arith.constant 0 : index
    %0 = vector.load %arg3[%c0, %c0_0, %c0_1] : memref<1x16x256xf32, #tpu.memory_space<vmem>>, vector<1x16x256xf32>
    %1 = vector.shape_cast %0 : vector<1x16x256xf32> to vector<16x256xf32>
    %c0_2 = arith.constant 0 : index
    %c0_3 = arith.constant 0 : index
    %2 = vector.load %arg4[%c0_2, %c0_3] : memref<32x16xbf16, #tpu.memory_space<vmem>>, vector<32x16xbf16>
    %3 = arith.truncf %1 : vector<16x256xf32> to vector<16x256xbf16>
    %cst = arith.constant dense<0.000000e+00> : vector<32x256xf32>
    %4 = tpu.matmul %2, %3, %cst {dimension_numbers = #tpu.dot_dimension_numbers<[1], [0], [0], [1], [0, 0, 1, 1], [], []>} : vector<32x16xbf16>, vector<16x256xbf16>, vector<32x256xf32> -> vector<32x256xf32>
    %c0_i32 = arith.constant 0 : i32
    %5 = arith.cmpi eq, %arg0, %c0_i32 : i32
    %c0_i32_4 = arith.constant 0 : i32
    %6 = arith.cmpi eq, %arg1, %c0_i32_4 : i32
    %7 = arith.andi %5, %6 : i1
    %c0_i32_5 = arith.constant 0 : i32
    %8 = arith.cmpi eq, %arg2, %c0_i32_5 : i32
    %9 = arith.andi %7, %8 : i1
    %10 = arith.extui %9 : i1 to i32
    %c0_i32_6 = arith.constant 0 : i32
    %11 = arith.cmpi ne, %10, %c0_i32_6 : i32
    scf.if %11 {
      %cst_18 = arith.constant 0.000000e+00 : f32
      %32 = vector.broadcast %cst_18 : f32 to vector<32x128xf32>
      %c0_19 = arith.constant 0 : index
      %c0_20 = arith.constant 0 : index
      %33 = vector.load %arg7[%c0_19, %c0_20] : memref<32x128xf32, #tpu.memory_space<vmem>>, vector<32x128xf32>
      tpu.vector_store %arg7[%c0_19, %c0_20], %32 {strides = array<i32>} : memref<32x128xf32, #tpu.memory_space<vmem>>, vector<32x128xf32>,
      %cst_21 = arith.constant 0.000000e+00 : f32
      %34 = vector.broadcast %cst_21 : f32 to vector<32x128xf32>
      %c0_22 = arith.constant 0 : index
      %c0_23 = arith.constant 0 : index
      %35 = vector.load %arg8[%c0_22, %c0_23] : memref<32x128xf32, #tpu.memory_space<vmem>>, vector<32x128xf32>
      tpu.vector_store %arg8[%c0_22, %c0_23], %34 {strides = array<i32>} : memref<32x128xf32, #tpu.memory_space<vmem>>, vector<32x128xf32>,
    } else {
    }
    %c0_i32_7 = arith.constant 0 : i32
    %12 = arith.cmpi eq, %arg0, %c0_i32_7 : i32
    %13 = arith.extui %12 : i1 to i32
    %c0_i32_8 = arith.constant 0 : i32
    %14 = arith.cmpi ne, %13, %c0_i32_8 : i32
    scf.if %14 {
      %c0_18 = arith.constant 0 : index
      %c0_19 = arith.constant 0 : index
      %32 = vector.load %arg7[%c0_18, %c0_19] : memref<32x128xf32, #tpu.memory_space<vmem>>, vector<32x128xf32>
      %33 = vector.extract_strided_slice %4 {offsets = [0, 0], sizes = [32, 128], strides = [1, 1]} : vector<32x256xf32> to vector<32x128xf32>
      %34 = vector.extract_strided_slice %4 {offsets = [0, 128], sizes = [32, 128], strides = [1, 1]} : vector<32x256xf32> to vector<32x128xf32>
      %35 = arith.addf %33, %34 : vector<32x128xf32>
      %36 = arith.addf %32, %35 : vector<32x128xf32>
      %c0_20 = arith.constant 0 : index
      %c0_21 = arith.constant 0 : index
      %37 = vector.load %arg7[%c0_20, %c0_21] : memref<32x128xf32, #tpu.memory_space<vmem>>, vector<32x128xf32>
      tpu.vector_store %arg7[%c0_20, %c0_21], %36 {strides = array<i32>} : memref<32x128xf32, #tpu.memory_space<vmem>>, vector<32x128xf32>,
      %c0_22 = arith.constant 0 : index
      %c0_23 = arith.constant 0 : index
      %38 = vector.load %arg8[%c0_22, %c0_23] : memref<32x128xf32, #tpu.memory_space<vmem>>, vector<32x128xf32>
      %39 = arith.mulf %4, %4 : vector<32x256xf32>
      %40 = vector.extract_strided_slice %39 {offsets = [0, 0], sizes = [32, 128], strides = [1, 1]} : vector<32x256xf32> to vector<32x128xf32>
      %41 = vector.extract_strided_slice %39 {offsets = [0, 128], sizes = [32, 128], strides = [1, 1]} : vector<32x256xf32> to vector<32x128xf32>
      %42 = arith.addf %40, %41 : vector<32x128xf32>
      %43 = arith.addf %38, %42 : vector<32x128xf32>
      %c0_24 = arith.constant 0 : index
      %c0_25 = arith.constant 0 : index
      %44 = vector.load %arg8[%c0_24, %c0_25] : memref<32x128xf32, #tpu.memory_space<vmem>>, vector<32x128xf32>
      tpu.vector_store %arg8[%c0_24, %c0_25], %43 {strides = array<i32>} : memref<32x128xf32, #tpu.memory_space<vmem>>, vector<32x128xf32>,
    } else {
    }
    %c1_i32 = arith.constant 1 : i32
    %15 = arith.cmpi eq, %arg0, %c1_i32 : i32
    %c0_i32_9 = arith.constant 0 : i32
    %16 = arith.cmpi eq, %arg1, %c0_i32_9 : i32
    %17 = arith.andi %15, %16 : i1
    %c0_i32_10 = arith.constant 0 : i32
    %18 = arith.cmpi eq, %arg2, %c0_i32_10 : i32
    %19 = arith.andi %17, %18 : i1
    %20 = arith.extui %19 : i1 to i32
    %c0_i32_11 = arith.constant 0 : i32
    %21 = arith.cmpi ne, %20, %c0_i32_11 : i32
    scf.if %21 {
      %c0_18 = arith.constant 0 : index
      %c0_19 = arith.constant 0 : index
      %32 = vector.load %arg7[%c0_18, %c0_19] : memref<32x128xf32, #tpu.memory_space<vmem>>, vector<32x128xf32>
      %cst_20 = arith.constant dense<0.000000e+00> : vector<32xf32>
      %33 = vector.multi_reduction <add>, %32, %cst_20 [1] : vector<32x128xf32> to vector<32xf32>
      %34 = vector.shape_cast %33 : vector<32xf32> to vector<32x1xf32>
      %cst_21 = arith.constant 0.001953125 : f32
      %35 = vector.broadcast %cst_21 : f32 to vector<32x1xf32>
      %36 = arith.mulf %34, %35 : vector<32x1xf32>
      %c0_22 = arith.constant 0 : index
      %c0_23 = arith.constant 0 : index
      %37 = vector.load %arg8[%c0_22, %c0_23] : memref<32x128xf32, #tpu.memory_space<vmem>>, vector<32x128xf32>
      %cst_24 = arith.constant dense<0.000000e+00> : vector<32xf32>
      %38 = vector.multi_reduction <add>, %37, %cst_24 [1] : vector<32x128xf32> to vector<32xf32>
      %39 = vector.shape_cast %38 : vector<32xf32> to vector<32x1xf32>
      %cst_25 = arith.constant 0.001953125 : f32
      %40 = vector.broadcast %cst_25 : f32 to vector<32x1xf32>
      %41 = arith.mulf %39, %40 : vector<32x1xf32>
      %42 = arith.mulf %36, %36 : vector<32x1xf32>
      %43 = arith.subf %41, %42 : vector<32x1xf32>
      %cst_26 = arith.constant 0.000000e+00 : f32
      %44 = vector.broadcast %cst_26 : f32 to vector<32x1xf32>
      %45 = arith.maximumf %43, %44 : vector<32x1xf32>
      %c0_27 = arith.constant 0 : index
      %c0_28 = arith.constant 0 : index
      %46 = vector.load %arg9[%c0_27, %c0_28] : memref<32x2xf32, #tpu.memory_space<vmem>>, vector<32x1xf32>
      tpu.vector_store %arg9[%c0_27, %c0_28], %36 {strides = array<i32>} : memref<32x2xf32, #tpu.memory_space<vmem>>, vector<32x1xf32>,
      %cst_29 = arith.constant 9.99999974E-6 : f32
      %47 = vector.broadcast %cst_29 : f32 to vector<32x1xf32>
      %48 = arith.addf %45, %47 : vector<32x1xf32>
      %49 = math.rsqrt %48 : vector<32x1xf32>
      %c0_30 = arith.constant 0 : index
      %c1 = arith.constant 1 : index
      %50 = vector.load %arg9[%c0_30, %c1] : memref<32x2xf32, #tpu.memory_space<vmem>>, vector<32x1xf32>
      tpu.vector_store %arg9[%c0_30, %c1], %49 {strides = array<i32>} : memref<32x2xf32, #tpu.memory_space<vmem>>, vector<32x1xf32>,
      %cst_31 = arith.constant 0.000000e+00 : f32
      %51 = vector.broadcast %cst_31 : f32 to vector<32x128xf32>
      %c0_32 = arith.constant 0 : index
      %c0_33 = arith.constant 0 : index
      %52 = vector.load %arg7[%c0_32, %c0_33] : memref<32x128xf32, #tpu.memory_space<vmem>>, vector<32x128xf32>
      tpu.vector_store %arg7[%c0_32, %c0_33], %51 {strides = array<i32>} : memref<32x128xf32, #tpu.memory_space<vmem>>, vector<32x128xf32>,
      %cst_34 = arith.constant 0.000000e+00 : f32
      %53 = vector.broadcast %cst_34 : f32 to vector<32x128xf32>
      %c0_35 = arith.constant 0 : index
      %c0_36 = arith.constant 0 : index
      %54 = vector.load %arg8[%c0_35, %c0_36] : memref<32x128xf32, #tpu.memory_space<vmem>>, vector<32x128xf32>
      tpu.vector_store %arg8[%c0_35, %c0_36], %53 {strides = array<i32>} : memref<32x128xf32, #tpu.memory_space<vmem>>, vector<32x128xf32>,
    } else {
    }
    %c1_i32_12 = arith.constant 1 : i32
    %22 = arith.cmpi eq, %arg0, %c1_i32_12 : i32
    %23 = arith.extui %22 : i1 to i32
    %c0_i32_13 = arith.constant 0 : i32
    %24 = arith.cmpi ne, %23, %c0_i32_13 : i32
    scf.if %24 {
      %c0_18 = arith.constant 0 : index
      %c0_19 = arith.constant 0 : index
      %32 = vector.load %arg9[%c0_18, %c0_19] : memref<32x2xf32, #tpu.memory_space<vmem>>, vector<32x2xf32>
      %33 = vector.extract_strided_slice %32 {offsets = [0, 0], sizes = [32, 1], strides = [1, 1]} : vector<32x2xf32> to vector<32x1xf32>
      %34 = vector.broadcast %33 : vector<32x1xf32> to vector<32x256xf32>
      %35 = arith.subf %4, %34 : vector<32x256xf32>
      %36 = vector.extract_strided_slice %32 {offsets = [0, 1], sizes = [32, 1], strides = [1, 1]} : vector<32x2xf32> to vector<32x1xf32>
      %37 = vector.broadcast %36 : vector<32x1xf32> to vector<32x256xf32>
      %38 = arith.mulf %35, %37 : vector<32x256xf32>
      %c0_20 = arith.constant 0 : index
      %c0_21 = arith.constant 0 : index
      %c0_22 = arith.constant 0 : index
      %39 = vector.load %arg5[%c0_20, %c0_21, %c0_22] : memref<1x32x256xf32, #tpu.memory_space<vmem>>, vector<1x32x256xf32>
      %40 = vector.shape_cast %39 : vector<1x32x256xf32> to vector<32x256xf32>
      %cst_23 = arith.constant 0.000000e+00 : f32
      %41 = vector.broadcast %cst_23 : f32 to vector<32x256xf32>
      %42 = arith.cmpf ogt, %40, %41 : vector<32x256xf32>
      %cst_24 = arith.constant 0.000000e+00 : f32
      %43 = vector.broadcast %cst_24 : f32 to vector<32x256xf32>
      %44 = arith.cmpf ogt, %38, %43 : vector<32x256xf32>
      %45 = arith.xori %44, %42 : vector<32x256xi1>
      %46 = arith.extui %45 : vector<32x256xi1> to vector<32x256xi32>
      %47 = arith.sitofp %46 : vector<32x256xi32> to vector<32x256xf32>
      %cst_25 = arith.constant 1.000000e+00 : f32
      %48 = vector.broadcast %cst_25 : f32 to vector<32x256xf32>
      %49 = arith.addf %38, %48 : vector<32x256xf32>
      %50 = arith.mulf %49, %49 : vector<32x256xf32>
      %cst_26 = arith.constant -1.000000e+00 : f32
      %51 = vector.broadcast %cst_26 : f32 to vector<32x256xf32>
      %52 = arith.cmpf ogt, %38, %51 : vector<32x256xf32>
      %cst_27 = arith.constant dense<true> : vector<32x256xi1>
      %53 = arith.xori %42, %cst_27 : vector<32x256xi1>
      %54 = arith.andi %52, %53 : vector<32x256xi1>
      %55 = arith.extui %54 : vector<32x256xi1> to vector<32x256xi32>
      %56 = arith.sitofp %55 : vector<32x256xi32> to vector<32x256xf32>
      %57 = arith.mulf %50, %56 : vector<32x256xf32>
      %cst_28 = arith.constant 1.000000e+00 : f32
      %58 = vector.broadcast %cst_28 : f32 to vector<32x256xf32>
      %59 = arith.subf %38, %58 : vector<32x256xf32>
      %60 = arith.mulf %59, %59 : vector<32x256xf32>
      %cst_29 = arith.constant 1.000000e+00 : f32
      %61 = vector.broadcast %cst_29 : f32 to vector<32x256xf32>
      %62 = arith.cmpf ole, %38, %61 : vector<32x256xf32>
      %63 = arith.andi %62, %42 : vector<32x256xi1>
      %64 = arith.extui %63 : vector<32x256xi1> to vector<32x256xi32>
      %65 = arith.sitofp %64 : vector<32x256xi32> to vector<32x256xf32>
      %66 = arith.mulf %60, %65 : vector<32x256xf32>
      %67 = arith.addf %57, %66 : vector<32x256xf32>
      %c0_30 = arith.constant 0 : index
      %c0_31 = arith.constant 0 : index
      %68 = vector.load %arg7[%c0_30, %c0_31] : memref<32x128xf32, #tpu.memory_space<vmem>>, vector<32x128xf32>
      %69 = vector.extract_strided_slice %47 {offsets = [0, 0], sizes = [32, 128], strides = [1, 1]} : vector<32x256xf32> to vector<32x128xf32>
      %70 = vector.extract_strided_slice %47 {offsets = [0, 128], sizes = [32, 128], strides = [1, 1]} : vector<32x256xf32> to vector<32x128xf32>
      %71 = arith.addf %69, %70 : vector<32x128xf32>
      %72 = arith.addf %68, %71 : vector<32x128xf32>
      %c0_32 = arith.constant 0 : index
      %c0_33 = arith.constant 0 : index
      %73 = vector.load %arg7[%c0_32, %c0_33] : memref<32x128xf32, #tpu.memory_space<vmem>>, vector<32x128xf32>
      tpu.vector_store %arg7[%c0_32, %c0_33], %72 {strides = array<i32>} : memref<32x128xf32, #tpu.memory_space<vmem>>, vector<32x128xf32>,
      %c0_34 = arith.constant 0 : index
      %c0_35 = arith.constant 0 : index
      %74 = vector.load %arg8[%c0_34, %c0_35] : memref<32x128xf32, #tpu.memory_space<vmem>>, vector<32x128xf32>
      %75 = vector.extract_strided_slice %67 {offsets = [0, 0], sizes = [32, 128], strides = [1, 1]} : vector<32x256xf32> to vector<32x128xf32>
      %76 = vector.extract_strided_slice %67 {offsets = [0, 128], sizes = [32, 128], strides = [1, 1]} : vector<32x256xf32> to vector<32x128xf32>
      %77 = arith.addf %75, %76 : vector<32x128xf32>
      %78 = arith.addf %74, %77 : vector<32x128xf32>
      %c0_36 = arith.constant 0 : index
      %c0_37 = arith.constant 0 : index
      %79 = vector.load %arg8[%c0_36, %c0_37] : memref<32x128xf32, #tpu.memory_space<vmem>>, vector<32x128xf32>
      tpu.vector_store %arg8[%c0_36, %c0_37], %78 {strides = array<i32>} : memref<32x128xf32, #tpu.memory_space<vmem>>, vector<32x128xf32>,
    } else {
    }
    %c1_i32_14 = arith.constant 1 : i32
    %25 = arith.cmpi eq, %arg0, %c1_i32_14 : i32
    %c1_i32_15 = arith.constant 1 : i32
    %26 = arith.cmpi eq, %arg1, %c1_i32_15 : i32
    %27 = arith.andi %25, %26 : i1
    %c0_i32_16 = arith.constant 0 : i32
    %28 = arith.cmpi eq, %arg2, %c0_i32_16 : i32
    %29 = arith.andi %27, %28 : i1
    %30 = arith.extui %29 : i1 to i32
    %c0_i32_17 = arith.constant 0 : i32
    %31 = arith.cmpi ne, %30, %c0_i32_17 : i32
    scf.if %31 {
      %c0_18 = arith.constant 0 : index
      %c0_19 = arith.constant 0 : index
      %32 = vector.load %arg7[%c0_18, %c0_19] : memref<32x128xf32, #tpu.memory_space<vmem>>, vector<32x128xf32>
      %33 = vector.shape_cast %32 : vector<32x128xf32> to vector<1x32x128xf32>
      %cst_20 = arith.constant dense<0.000000e+00> : vector<1xf32>
      %34 = vector.multi_reduction <add>, %33, %cst_20 [1, 2] : vector<1x32x128xf32> to vector<1xf32>
      %35 = vector.shape_cast %34 : vector<1xf32> to vector<1x1x1xf32>
      %36 = vector.extract %35[0, 0, 0] : f32 from vector<1x1x1xf32>
      %c0_21 = arith.constant 0 : index
      %c0_22 = arith.constant 0 : index
      %37 = memref.load %arg6[%c0_21, %c0_22] : memref<1x2xf32, #tpu.memory_space<smem>>
      memref.store %36, %arg6[%c0_21, %c0_22] : memref<1x2xf32, #tpu.memory_space<smem>>
      %c0_23 = arith.constant 0 : index
      %c0_24 = arith.constant 0 : index
      %38 = vector.load %arg8[%c0_23, %c0_24] : memref<32x128xf32, #tpu.memory_space<vmem>>, vector<32x128xf32>
      %39 = vector.shape_cast %38 : vector<32x128xf32> to vector<1x32x128xf32>
      %cst_25 = arith.constant dense<0.000000e+00> : vector<1xf32>
      %40 = vector.multi_reduction <add>, %39, %cst_25 [1, 2] : vector<1x32x128xf32> to vector<1xf32>
      %41 = vector.shape_cast %40 : vector<1xf32> to vector<1x1x1xf32>
      %42 = vector.extract %41[0, 0, 0] : f32 from vector<1x1x1xf32>
      %c0_26 = arith.constant 0 : index
      %c1 = arith.constant 1 : index
      %43 = memref.load %arg6[%c0_26, %c1] : memref<1x2xf32, #tpu.memory_space<smem>>
      memref.store %42, %arg6[%c0_26, %c1] : memref<1x2xf32, #tpu.memory_space<smem>>
    } else {
    }
    return
  }
  func.func @transform_0(%arg0: i32, %arg1: i32, %arg2: i32) -> (i32, i32, i32) {
    %c0_i32 = arith.constant 0 : i32
    %c0_i32_0 = arith.constant 0 : i32
    return %arg1, %c0_i32, %arg2 : i32, i32, i32
  }
  func.func @transform_1(%arg0: i32, %arg1: i32, %arg2: i32) -> (i32, i32) {
    %c0_i32 = arith.constant 0 : i32
    %c0_i32_0 = arith.constant 0 : i32
    %c0_i32_1 = arith.constant 0 : i32
    return %c0_i32, %c0_i32_0 : i32, i32
  }
  func.func @transform_2(%arg0: i32, %arg1: i32, %arg2: i32) -> (i32, i32, i32) {
    %0 = arith.muli %arg1, %arg0 : i32
    %1 = arith.muli %arg2, %arg0 : i32
    %c0_i32 = arith.constant 0 : i32
    %c0_i32_0 = arith.constant 0 : i32
    return %0, %c0_i32, %1 : i32, i32, i32
  }
  func.func @transform_3(%arg0: i32, %arg1: i32, %arg2: i32) -> (i32, i32) {
    %c0_i32 = arith.constant 0 : i32
    %c0_i32_0 = arith.constant 0 : i32
    %c0_i32_1 = arith.constant 0 : i32
    return %c0_i32, %c0_i32_0 : i32, i32
  }
}

</mosaic_0001>

<llo_original>
// kernel: tpu_custom_call.1
$region0: #{tpu_custom_call.1}
  #allocation0 [shape = 'u32[]', space=smem, size = 0x4, offset = 0x4, fixed_abs, tag = 'smem constant byte address 0x4 - core index']
  #allocation1 [shape = 'u32[144,128]{1,0:T(1,128)}', space=vmem, size = 0x12000, scoped, tag = 'internal scratch']
  #allocation2 [shape = 'f32[32,128]{1,0:T(8,128)}', space=vmem, size = 0x4000, scoped, tag = 'scratch operand']
  #allocation3 [shape = 'f32[32,128]{1,0:T(8,128)}', space=vmem, size = 0x4000, scoped, tag = 'scratch operand']
  #allocation4 [shape = 'f32[32,2]{1,0:T(8,128)}', space=vmem, size = 0x4000, scoped, tag = 'scratch operand']
  %s0 = inlined_call_operand.hbm [shape: f32[2,16,256], index: 0, kind: input, shape index: {}]
  %s1 = inlined_call_operand.vmem [shape: bf16[32,16], index: 1, kind: input, shape index: {}]
  %s2 = inlined_call_operand.hbm [shape: f32[2,32,256], index: 2, kind: input, shape index: {}]
  %s3 = inlined_call_operand.hbm [shape: f32[1,2], index: 3, kind: output, shape index: {}]
  %s4 = sld [smem:[#allocation0]]
  $region73: #{tpu_custom_call.1} parent=0
    _
  %s6 = ssub.s32 1, %s4
  %s7 = scalar_select 0, %s6, %s4
  $region1: #{tpu_custom_call.1} parent=0
    #allocation5 [shape = 'u8[32768]{0}', space=vmem, size = 0x8000, scoped, tag = 'input window, operand 0']
    #allocation6 [shape = 's32[2]{0}', space=sflag, size = 0x8, scoped, tag = 'scoped memory for tpu_custom_call.1']
    #allocation7 [shape = 's32[2]{0}', space=sflag, size = 0x8, scoped, tag = 'scoped memory for tpu_custom_call.1']
    #allocation8 [shape = 'u8[65536]{0}', space=vmem, size = 0x10000, scoped, tag = 'input window, operand 2']
    #allocation9 [shape = 's32[2]{0}', space=sflag, size = 0x8, scoped, tag = 'scoped memory for tpu_custom_call.1']
    #allocation10 [shape = 'u8[512]{0}', space=smem, size = 0x200, scoped, tag = 'output window, operand 0, single buffered']
    %8 = vsyncpa [#allocation6], 0
    %s9 = scalar_lea.sflag [#allocation6], 1
    %10 = vsyncpa %s9, 0
    %11 = vsyncpa [#allocation9], 0
    %s12 = scalar_lea.sflag [#allocation9], 1
    %13 = vsyncpa %s12, 0
    %14 = vsyncpa [#allocation7], 0
    loop: start=0, step=1, limit=6
    $region2: #{tpu_custom_call.1} parent=1 // loop_pre_header
      _
    $region3: #{tpu_custom_call.1} parent=1 // loop_header
      %s16 = sphi 0, %s20
      %p17 = scmp.ge.s32.totalorder %s16, 6
      %s23 = sphi 0, %s42
      %s24 = sphi 0, %s38
      %s25 = sphi 0, %s34
      %s26 = sphi 0, %s23
      %s27 = sphi 0, %s24
      %s28 = sphi 0, %s25
      %s29 = sphi 0, %s26
      %s30 = sphi 0, %s27
      %s31 = sphi 0, %s28
      %s47 = sphi 0, %s49
      %s50 = sphi 0, %s47
      %s51 = sphi 0, %s50
      %s67 = sphi 0, %s51
      %s71 = sphi 0, %s71
      %s73 = sphi 0, %s71
      %s74 = sphi 0, %s73
      %s88 = sphi 0, %s74
      %s100 = sphi 0, %s102
      %s103 = sphi 0, %s100
      %s104 = sphi 0, %s103
      %s120 = sphi 0, %s104
      %s124 = sphi 0, %s124
      %s126 = sphi 0, %s124
      %s127 = sphi 0, %s126
      %s141 = sphi 0, %s127
    $region4: #{tpu_custom_call.1} parent=1 // loop_header_branch
      %19 = sbr.rel (%p17) target = $region8
    $region5: #{tpu_custom_call.1} parent=1 // loop_body
      %s21 = ssub.s32 %s16, 1
      %s22 = ssub.s32 %s16, 2
      %s32 = sadd.s32 1, %s25
      %p33 = scmp.ge.s32.totalorder %s32, 1
      %s34 = scalar_select %p33, 0, %s32
      %s35 = sadd.s32 1, %s24
      %s36 = scalar_select %p33, %s35, %s24
      %p37 = scmp.ge.s32.totalorder %s36, 2
      %s38 = scalar_select %p37, 0, %s36
      %s39 = sadd.s32 1, %s23
      %s40 = scalar_select %p37, %s39, %s23
      %p41 = scmp.ge.s32.totalorder %s40, 2
      %s42 = scalar_select %p41, 0, %s40
      %s43 = ssub.s32 %s24, %s38
      %s44 = ssub.s32 %s25, %s34
      %s45 = sor.u32 %s43, %s44
      %p46 = scmp.eq.s32.totalorder %s45, 0
      %s48 = sadd.s32 %s47, 1
      %s49 = scalar_select %p46, %s47, %s48
      %p52 = pneg %p46
      %p53 = scmp.eq.s32.totalorder %s16, 3
      %p54 = por %p52, %p53
      %p55 = scmp.ne.s32.totalorder %s47, %s50
      %p56 = scmp.eq.s32.totalorder %s16, 0
      %p57 = por %p55, %p56
      %p58 = scmp.ne.s32.totalorder %s47, %s50
      %p59 = scmp.eq.s32.totalorder %s21, 3
      %p60 = por %p58, %p59
      %p61 = scmp.ne.s32.totalorder %s50, %s51
      %p62 = scmp.eq.s32.totalorder %s21, 0
      %p63 = por %p61, %p62
      %p64 = scmp.ne.s32.totalorder %s50, %s51
      %p65 = scmp.eq.s32.totalorder %s22, 3
      %p66 = por %p64, %p65
      %p68 = scmp.ne.s32.totalorder %s51, %s67
      %p69 = scmp.eq.s32.totalorder %s22, 0
      %p70 = por %p68, %p69
      %s72 = sadd.s32 %s71, 1
      %p75 = scmp.eq.s32.totalorder %s16, 3
      %p76 = scmp.ne.s32.totalorder %s71, %s73
      %p77 = scmp.eq.s32.totalorder %s16, 0
      %p78 = por %p76, %p77
      %p79 = scmp.ne.s32.totalorder %s71, %s73
      %p80 = scmp.eq.s32.totalorder %s21, 3
      %p81 = por %p79, %p80
      %p82 = scmp.ne.s32.totalorder %s73, %s74
      %p83 = scmp.eq.s32.totalorder %s21, 0
      %p84 = por %p82, %p83
      %p85 = scmp.ne.s32.totalorder %s73, %s74
      %p86 = scmp.eq.s32.totalorder %s22, 3
      %p87 = por %p85, %p86
      %p89 = scmp.ne.s32.totalorder %s74, %s88
      %p90 = scmp.eq.s32.totalorder %s22, 0
      %p91 = por %p89, %p90
      %s92 = smul.u32 %s24, %s23
      %s93 = smul.u32 %s25, %s23
      %s94 = smul.u32 %s38, %s42
      %s95 = smul.u32 %s34, %s42
      %s96 = ssub.s32 %s92, %s94
      %s97 = ssub.s32 %s93, %s95
      %s98 = sor.u32 %s96, %s97
      %p99 = scmp.eq.s32.totalorder %s98, 0
      %s101 = sadd.s32 %s100, 1
      %s102 = scalar_select %p99, %s100, %s101
      %p105 = pneg %p99
      %p106 = scmp.eq.s32.totalorder %s16, 3
      %p107 = por %p105, %p106
      %p108 = scmp.ne.s32.totalorder %s100, %s103
      %p109 = scmp.eq.s32.totalorder %s16, 0
      %p110 = por %p108, %p109
      %p111 = scmp.ne.s32.totalorder %s100, %s103
      %p112 = scmp.eq.s32.totalorder %s21, 3
      %p113 = por %p111, %p112
      %p114 = scmp.ne.s32.totalorder %s103, %s104
      %p115 = scmp.eq.s32.totalorder %s21, 0
      %p116 = por %p114, %p115
      %p117 = scmp.ne.s32.totalorder %s103, %s104
      %p118 = scmp.eq.s32.totalorder %s22, 3
      %p119 = por %p117, %p118
      %p121 = scmp.ne.s32.totalorder %s104, %s120
      %p122 = scmp.eq.s32.totalorder %s22, 0
      %p123 = por %p121, %p122
      %s125 = sadd.s32 %s124, 1
      %p128 = scmp.eq.s32.totalorder %s16, 3
      %p129 = scmp.ne.s32.totalorder %s124, %s126
      %p130 = scmp.eq.s32.totalorder %s16, 0
      %p131 = por %p129, %p130
      %p132 = scmp.ne.s32.totalorder %s124, %s126
      %p133 = scmp.eq.s32.totalorder %s21, 3
      %p134 = por %p132, %p133
      %p135 = scmp.ne.s32.totalorder %s126, %s127
      %p136 = scmp.eq.s32.totalorder %s21, 0
      %p137 = por %p135, %p136
      %p138 = scmp.ne.s32.totalorder %s126, %s127
      %p139 = scmp.eq.s32.totalorder %s22, 3
      %p140 = por %p138, %p139
      %p142 = scmp.ne.s32.totalorder %s127, %s141
      %p143 = scmp.eq.s32.totalorder %s22, 0
      %p144 = por %p142, %p143
      %p145 = scmp.le.s32.totalorder 1, %s16
      %p146 = scmp.lt.s32.totalorder %s16, 5
      %p147 = pnand %p145, %p146
      %p148 = pneg %p147
      // Predicated region
      $region9: #{tpu_custom_call.1} parent=5 // pred_check
        _
      $region10: #{tpu_custom_call.1} parent=5 // pred_check_branch
        %150 = sbr.rel (%p147) target = $region12
      $region11: #{tpu_custom_call.1} parent=5 // pred_region
        %s151 = ssub.s32 %s16, 1
        // Predicated region
        $region13: #{tpu_custom_call.1} parent=11 // pred_check
          %p152 = pneg %p84
        $region14: #{tpu_custom_call.1} parent=11 // pred_check_branch
          %154 = sbr.rel (%p152) target = $region16
        $region15: #{tpu_custom_call.1} parent=11 // pred_region
          _
        $region16: #{tpu_custom_call.1} parent=11 // pred_fallthru
          _
      $region12: #{tpu_custom_call.1} parent=5 // pred_fallthru
        _
      %p155 = scmp.lt.s32.totalorder %s16, 4
      // Predicated region
      $region17: #{tpu_custom_call.1} parent=5 // pred_check
        %p156 = pneg %p155
      $region18: #{tpu_custom_call.1} parent=5 // pred_check_branch
        %158 = sbr.rel (%p156) target = $region20
      $region19: #{tpu_custom_call.1} parent=5 // pred_region
        // Predicated region
        $region21: #{tpu_custom_call.1} parent=19 // pred_check
          %p159 = pneg %p57
        $region22: #{tpu_custom_call.1} parent=19 // pred_check_branch
          %161 = sbr.rel (%p159) target = $region24
        $region23: #{tpu_custom_call.1} parent=19 // pred_region
          %s162 = sand.u32 %s47, 1
          %s163 = scalar_lea.sflag [#allocation6], %s162
          %s164 = sand.u32 %s47, 1
          %s165 = smul.addr %s164, 32
          %s166 = scalar_lea.vmem [#allocation5], %s165
          %s167 = smul.u32 2, %s25
          %s169 = ssub.s32 512, 512
          %170 = vsyncadd %s163, %s169
          %s171 = smul.addr %s24, 4
          %s172 = sadd.s32 %s167, %s171
          %s173 = smul.addr %s172, 128
          %s174 = scalar_lea.hbm %s0, %s173
          %s175 = sshll.u32 %s166, 4
          %s176 = int_to_ptr.vmem [resolvable:$true] %s175
          %181 = dma.hbm_to_vmem [thread:$0]  %s174, 512, %s176, %s163, 256, 256, 16
        $region24: #{tpu_custom_call.1} parent=19 // pred_fallthru
          _
        // Predicated region
        $region25: #{tpu_custom_call.1} parent=19 // pred_check
          %p182 = pneg %p110
        $region26: #{tpu_custom_call.1} parent=19 // pred_check_branch
          %184 = sbr.rel (%p182) target = $region28
        $region27: #{tpu_custom_call.1} parent=19 // pred_region
          %s185 = sand.u32 %s100, 1
          %s186 = scalar_lea.sflag [#allocation9], %s185
          %s187 = sand.u32 %s100, 1
          %s188 = smul.addr %s187, 64
          %s189 = scalar_lea.vmem [#allocation8], %s188
          %s190 = smul.u32 %s24, %s23
          %s191 = smul.u32 %s25, %s23
          %s192 = smul.u32 2, %s191
          %s194 = ssub.s32 1024, 1024
          %195 = vsyncadd %s186, %s194
          %s196 = smul.addr %s190, 8
          %s197 = sadd.s32 %s192, %s196
          %s198 = smul.addr %s197, 128
          %s199 = scalar_lea.hbm %s2, %s198
          %s200 = sshll.u32 %s189, 4
          %s201 = int_to_ptr.vmem [resolvable:$true] %s200
          %206 = dma.hbm_to_vmem [thread:$0]  %s199, 1024, %s201, %s186, 256, 256, 16
        $region28: #{tpu_custom_call.1} parent=19 // pred_fallthru
          _
      $region20: #{tpu_custom_call.1} parent=5 // pred_fallthru
        _
      %p207 = scmp.le.s32.totalorder 1, %s16
      %p208 = scmp.lt.s32.totalorder %s16, 5
      %p209 = pnand %p207, %p208
      %p210 = pneg %p209
      // Predicated region
      $region29: #{tpu_custom_call.1} parent=5 // pred_check
        _
      $region30: #{tpu_custom_call.1} parent=5 // pred_check_branch
        %212 = sbr.rel (%p209) target = $region32
      $region31: #{tpu_custom_call.1} parent=5 // pred_region
        %s213 = ssub.s32 %s16, 1
        %s214 = sand.u32 %s50, 1
        %s215 = scalar_lea.sflag [#allocation6], %s214
        %s216 = sand.u32 %s50, 1
        %s217 = smul.addr %s216, 32
        %s218 = scalar_lea.vmem [#allocation5], %s217
        // Predicated region
        $region33: #{tpu_custom_call.1} parent=31 // pred_check
          %p219 = pneg %p63
        $region34: #{tpu_custom_call.1} parent=31 // pred_check_branch
          %221 = sbr.rel (%p219) target = $region36
        $region35: #{tpu_custom_call.1} parent=31 // pred_region
          %222 = dma.done %s215, 512
        $region36: #{tpu_custom_call.1} parent=31 // pred_fallthru
          _
        %s223 = sand.u32 %s103, 1
        %s224 = scalar_lea.sflag [#allocation9], %s223
        %s225 = sand.u32 %s103, 1
        %s226 = smul.addr %s225, 64
        %s227 = scalar_lea.vmem [#allocation8], %s226
        // Predicated region
        $region37: #{tpu_custom_call.1} parent=31 // pred_check
          %p228 = pneg %p116
        $region38: #{tpu_custom_call.1} parent=31 // pred_check_branch
          %230 = sbr.rel (%p228) target = $region40
        $region39: #{tpu_custom_call.1} parent=31 // pred_region
          %231 = dma.done %s224, 1024
        $region40: #{tpu_custom_call.1} parent=31 // pred_fallthru
          _
        %s232 = sand.u32 %s50, 1
        %s233 = scalar_lea.sflag [#allocation6], %s232
        %s234 = sand.u32 %s50, 1
        %s235 = smul.addr %s234, 32
        %s236 = scalar_lea.vmem [#allocation5], %s235
        %p237 = pneg %p63
        %p238 = pneg %p60
        %p239 = pneg %p84
        %p240 = pneg %p81
        %s241 = sand.u32 %s103, 1
        %s242 = scalar_lea.sflag [#allocation9], %s241
        %s243 = sand.u32 %s103, 1
        %s244 = smul.addr %s243, 64
        %s245 = scalar_lea.vmem [#allocation8], %s244
        %p246 = pneg %p116
        %p247 = pneg %p113
        %p248 = pneg %p137
        %p249 = pneg %p134
        %s250 = smul.u32 2, %s28
        %s251 = smul.u32 %s27, %s26
        %s252 = smul.u32 %s28, %s26
        %s253 = smul.u32 2, %s252
        %v255 = vld [vmem:[%s218] sm:$0xff]
        %v256 = vld [vmem:[%s218 + $0x8] sm:$0xff]
        %v257 = vld [vmem:[%s218 + $0x10] sm:$0xff]
        %v258 = vld [vmem:[%s218 + $0x18] sm:$0xff]
        %v259 = vld [vmem:[%s1] sm:$0xf]
        %v260 = vld [vmem:[%s1 + $0x4] sm:$0xf]
        %v261 = vld [vmem:[%s1 + $0x8] sm:$0xf]
        %v262 = vld [vmem:[%s1 + $0xc] sm:$0xf]
        %v263 = vpack.c.bf16 %v257, %v255
        %v264 = vpack.c.bf16 %v258, %v256
        %v269 = vunpack.c.l.b16 %v259
        %v270 = vunpack.c.l.b16 %v260
        %v271 = vunpack.c.l.b16 %v261
        %v272 = vunpack.c.l.b16 %v262
        %v273 = vpack.c.b16 %v270, %v269
        %v274 = vpack.c.b16 %v272, %v271
        %vm275 = vcmask 130048
        %v277 = vsel %vm275, %v273, 0
        %v280 = vsel %vm275, %v274, 0
        %282 = vmatprep.subr.bf16.mxu0 0
        %283 = vmatpush1.bf16.msra.mxu0 0
        %284 = vmatprep.subr.bf16.mxu0 0
        %285 = vmatpush1.bf16.msra.mxu0 0
        %286 = vmatprep.subr.bf16.mxu0 0
        %287 = vmatpush1.bf16.msra.mxu0 0
        %288 = vmatprep.subr.bf16.mxu0 0
        %289 = vmatpush1.bf16.msra.mxu0 0
        %290 = vmatprep.subr.bf16.mxu0 0
        %291 = vmatpush1.bf16.msra.mxu0 0
        %292 = vmatprep.subr.bf16.mxu0 0
        %293 = vmatpush1.bf16.msra.mxu0 0
        %294 = vmatprep.subr.bf16.mxu0 0
        %295 = vmatpush1.bf16.msra.mxu0 0
        %296 = vmatprep.subr.bf16.mxu0 %v264
        %297 = vmatpush1.bf16.msra.mxu0 %v263
        %298 = vmatprep.subr.bf16.mxu0 0
        %299 = vmatpush2.bf16.msra.mxu0 0
        %300 = vmatprep.subr.bf16.mxu0 0
        %301 = vmatpush2.bf16.msra.mxu0 0
        %302 = vmatprep.subr.bf16.mxu0 0
        %303 = vmatpush2.bf16.msra.mxu0 0
        %304 = vmatprep.subr.bf16.mxu0 0
        %305 = vmatpush2.bf16.msra.mxu0 0
        %306 = vmatprep.subr.bf16.mxu0 0
        %307 = vmatpush2.bf16.msra.mxu0 0
        %308 = vmatprep.subr.bf16.mxu0 0
        %309 = vmatpush2.bf16.msra.mxu0 0
        %310 = vmatprep.subr.bf16.mxu0 0
        %311 = vmatpush2.bf16.msra.mxu0 0
        %312 = vmatprep.subr.bf16.mxu0 0
        %313 = vmatpush2.bf16.msra.mxu0 0
        %314 = vmatprep.mubr.bf16.mxu0 0
        %315 = vmatmul.mubr.bf16.gmra.mxu0 %v277
        %v316 = vpop.f32.mrf.mxu0
        %v317 = vadd.f32 0.0, %v316
        %v318 = vpop.f32.mrf.mxu0
        %v319 = vadd.f32 0.0, %v318
        %v320 = vpop.f32.mrf.mxu0
        %v321 = vadd.f32 0.0, %v320
        %v322 = vpop.f32.mrf.mxu0
        %v323 = vadd.f32 0.0, %v322
        %324 = vmatprep.mubr.bf16.mxu0 0
        %325 = vmatmul.mubr.bf16.gmra.mxu0 %v280
        %v326 = vpop.f32.mrf.mxu0
        %v327 = vadd.f32 0.0, %v326
        %v328 = vpop.f32.mrf.mxu0
        %v329 = vadd.f32 0.0, %v328
        %v330 = vpop.f32.mrf.mxu0
        %v331 = vadd.f32 0.0, %v330
        %v332 = vpop.f32.mrf.mxu0
        %v333 = vadd.f32 0.0, %v332
        %334 = vdwg.mxu0
        %p335 = scmp.eq.s32.totalorder %s26, 0
        %p336 = scmp.eq.s32.totalorder %s27, 0
        %p337 = pnand %p335, %p336
        %p338 = pneg %p337
        %p339 = scmp.eq.s32.totalorder %s28, 0
        %p340 = pnand %p338, %p339
        %p341 = pneg %p340
        // Predicated region
        $region41: #{tpu_custom_call.1} parent=31 // pred_check
          _
        $region42: #{tpu_custom_call.1} parent=31 // pred_check_branch
          %343 = sbr.rel (%p340) target = $region44
        $region43: #{tpu_custom_call.1} parent=31 // pred_region
          %344 = vst [vmem:[#allocation2] sm:$0xff] 0.0
          %345 = vst [vmem:[#allocation2 + $0x8] sm:$0xff] 0.0
          %346 = vst [vmem:[#allocation2 + $0x10] sm:$0xff] 0.0
          %347 = vst [vmem:[#allocation2 + $0x18] sm:$0xff] 0.0
          %348 = vst [vmem:[#allocation3] sm:$0xff] 0.0
          %349 = vst [vmem:[#allocation3 + $0x8] sm:$0xff] 0.0
          %350 = vst [vmem:[#allocation3 + $0x10] sm:$0xff] 0.0
          %351 = vst [vmem:[#allocation3 + $0x18] sm:$0xff] 0.0
        $region44: #{tpu_custom_call.1} parent=31 // pred_fallthru
          _
        // Predicated region
        $region45: #{tpu_custom_call.1} parent=31 // pred_check
          %p352 = pneg %p335
        $region46: #{tpu_custom_call.1} parent=31 // pred_check_branch
          %354 = sbr.rel (%p352) target = $region48
        $region47: #{tpu_custom_call.1} parent=31 // pred_region
          %v355 = vld [vmem:[#allocation2] sm:$0xff]
          %v356 = vld [vmem:[#allocation2 + $0x8] sm:$0xff]
          %v357 = vld [vmem:[#allocation2 + $0x10] sm:$0xff]
          %v358 = vld [vmem:[#allocation2 + $0x18] sm:$0xff]
          %v359 = vadd.f32 %v317, %v319
          %v360 = vadd.f32 %v321, %v323
          %v361 = vadd.f32 %v327, %v329
          %v362 = vadd.f32 %v331, %v333
          %v363 = vadd.f32 %v355, %v359
          %v364 = vadd.f32 %v356, %v360
          %v365 = vadd.f32 %v357, %v361
          %v366 = vadd.f32 %v358, %v362
          %367 = vst [vmem:[#allocation2] sm:$0xff] %v363
          %368 = vst [vmem:[#allocation2 + $0x8] sm:$0xff] %v364
          %369 = vst [vmem:[#allocation2 + $0x10] sm:$0xff] %v365
          %370 = vst [vmem:[#allocation2 + $0x18] sm:$0xff] %v366
          %v371 = vld [vmem:[#allocation3] sm:$0xff]
          %v372 = vld [vmem:[#allocation3 + $0x8] sm:$0xff]
          %v373 = vld [vmem:[#allocation3 + $0x10] sm:$0xff]
          %v374 = vld [vmem:[#allocation3 + $0x18] sm:$0xff]
          %v375 = vmul.f32 %v317, %v317
          %v376 = vmul.f32 %v319, %v319
          %v377 = vmul.f32 %v321, %v321
          %v378 = vmul.f32 %v323, %v323
          %v379 = vmul.f32 %v327, %v327
          %v380 = vmul.f32 %v329, %v329
          %v381 = vmul.f32 %v331, %v331
          %v382 = vmul.f32 %v333, %v333
          %v383 = vadd.f32 %v375, %v376
          %v384 = vadd.f32 %v377, %v378
          %v385 = vadd.f32 %v379, %v380
          %v386 = vadd.f32 %v381, %v382
          %v387 = vadd.f32 %v371, %v383
          %v388 = vadd.f32 %v372, %v384
          %v389 = vadd.f32 %v373, %v385
          %v390 = vadd.f32 %v374, %v386
          %391 = vst [vmem:[#allocation3] sm:$0xff] %v387
          %392 = vst [vmem:[#allocation3 + $0x8] sm:$0xff] %v388
          %393 = vst [vmem:[#allocation3 + $0x10] sm:$0xff] %v389
          %394 = vst [vmem:[#allocation3 + $0x18] sm:$0xff] %v390
        $region48: #{tpu_custom_call.1} parent=31 // pred_fallthru
          _
        %p395 = scmp.eq.s32.totalorder %s26, 1
        %p396 = pnand %p395, %p336
        %p397 = pneg %p396
        %p398 = pnand %p397, %p339
        %p399 = pneg %p398
        // Predicated region
        $region49: #{tpu_custom_call.1} parent=31 // pred_check
          _
        $region50: #{tpu_custom_call.1} parent=31 // pred_check_branch
          %401 = sbr.rel (%p398) target = $region52
        $region51: #{tpu_custom_call.1} parent=31 // pred_region
          %v402 = vld [vmem:[#allocation2] sm:$0xff]
          %v403 = vld [vmem:[#allocation2 + $0x8] sm:$0xff]
          %v404 = vld [vmem:[#allocation2 + $0x10] sm:$0xff]
          %v405 = vld [vmem:[#allocation2 + $0x18] sm:$0xff]
          %406 = vadd.xlane.f32.xlu0 %v402
          %v407 = vpop.xlane.xlu0 %406
          %408 = vadd.xlane.f32.xlu0 %v403
          %v409 = vpop.xlane.xlu0 %408
          %410 = vadd.xlane.f32.xlu0 %v404
          %v411 = vpop.xlane.xlu0 %410
          %412 = vadd.xlane.f32.xlu0 %v405
          %v413 = vpop.xlane.xlu0 %412
          %v414 = vmul.f32 %v407, 0.001953125
          %v415 = vmul.f32 %v409, 0.001953125
          %v416 = vmul.f32 %v411, 0.001953125
          %v417 = vmul.f32 %v413, 0.001953125
          %v418 = vld [vmem:[#allocation3] sm:$0xff]
          %v419 = vld [vmem:[#allocation3 + $0x8] sm:$0xff]
          %v420 = vld [vmem:[#allocation3 + $0x10] sm:$0xff]
          %v421 = vld [vmem:[#allocation3 + $0x18] sm:$0xff]
          %422 = vadd.xlane.f32.xlu0 %v418
          %v423 = vpop.xlane.xlu0 %422
          %424 = vadd.xlane.f32.xlu0 %v419
          %v425 = vpop.xlane.xlu0 %424
          %426 = vadd.xlane.f32.xlu0 %v420
          %v427 = vpop.xlane.xlu0 %426
          %428 = vadd.xlane.f32.xlu0 %v421
          %v429 = vpop.xlane.xlu0 %428
          %v430 = vmul.f32 %v423, 0.001953125
          %v431 = vmul.f32 %v425, 0.001953125
          %v432 = vmul.f32 %v427, 0.001953125
          %v433 = vmul.f32 %v429, 0.001953125
          %v434 = vmul.f32 %v414, %v414
          %v435 = vmul.f32 %v415, %v415
          %v436 = vmul.f32 %v416, %v416
          %v437 = vmul.f32 %v417, %v417
          %v438 = vsub.f32 %v430, %v434
          %v439 = vsub.f32 %v431, %v435
          %v440 = vsub.f32 %v432, %v436
          %v441 = vsub.f32 %v433, %v437
          %v442 = vmax.f32 %v438, 0.0
          %v443 = vmax.f32 %v439, 0.0
          %v444 = vmax.f32 %v440, 0.0
          %v445 = vmax.f32 %v441, 0.0
          %vm446 = vcmask 7168
          %447 = vst.msk [vmem:[#allocation4] sm:$0xff] %vm446, %v414
          %448 = vst.msk [vmem:[#allocation4 + $0x8] sm:$0xff] %vm446, %v415
          %449 = vst.msk [vmem:[#allocation4 + $0x10] sm:$0xff] %vm446, %v416
          %450 = vst.msk [vmem:[#allocation4 + $0x18] sm:$0xff] %vm446, %v417
          %v451 = vadd.f32 %v442, 1e-05
          %v452 = vadd.f32 %v443, 1e-05
          %v453 = vadd.f32 %v444, 1e-05
          %v454 = vadd.f32 %v445, 1e-05
          %v455 = vrsqrt.pop %v451
          %v456 = vrsqrt.pop %v452
          %v457 = vrsqrt.pop %v453
          %v458 = vrsqrt.pop %v454
          %vm459 = vcmask 15368
          %460 = vst.msk [vmem:[#allocation4] sm:$0xff] %vm459, %v455
          %461 = vst.msk [vmem:[#allocation4 + $0x8] sm:$0xff] %vm459, %v456
          %462 = vst.msk [vmem:[#allocation4 + $0x10] sm:$0xff] %vm459, %v457
          %463 = vst.msk [vmem:[#allocation4 + $0x18] sm:$0xff] %vm459, %v458
          %464 = vst [vmem:[#allocation2] sm:$0xff] 0.0
          %465 = vst [vmem:[#allocation2 + $0x8] sm:$0xff] 0.0
          %466 = vst [vmem:[#allocation2 + $0x10] sm:$0xff] 0.0
          %467 = vst [vmem:[#allocation2 + $0x18] sm:$0xff] 0.0
          %468 = vst [vmem:[#allocation3] sm:$0xff] 0.0
          %469 = vst [vmem:[#allocation3 + $0x8] sm:$0xff] 0.0
          %470 = vst [vmem:[#allocation3 + $0x10] sm:$0xff] 0.0
          %471 = vst [vmem:[#allocation3 + $0x18] sm:$0xff] 0.0
        $region52: #{tpu_custom_call.1} parent=31 // pred_fallthru
          _
        // Predicated region
        $region53: #{tpu_custom_call.1} parent=31 // pred_check
          %p472 = pneg %p395
        $region54: #{tpu_custom_call.1} parent=31 // pred_check_branch
          %474 = sbr.rel (%p472) target = $region56
        $region55: #{tpu_custom_call.1} parent=31 // pred_region
          %v475 = vld [vmem:[#allocation4] sm:$0xff]
          %v476 = vld [vmem:[#allocation4 + $0x8] sm:$0xff]
          %v477 = vld [vmem:[#allocation4 + $0x10] sm:$0xff]
          %v478 = vld [vmem:[#allocation4 + $0x18] sm:$0xff]
          %480 = vset.pattern.permute.xlu0 0
          %481 = vperm.xlu0 %480, %v475
          %v482 = vpop.permute.xlu0 %481
          %485 = vset.pattern.permute.xlu0 0
          %486 = vperm.xlu0 %485, %v476
          %v487 = vpop.permute.xlu0 %486
          %490 = vset.pattern.permute.xlu0 0
          %491 = vperm.xlu0 %490, %v477
          %v492 = vpop.permute.xlu0 %491
          %495 = vset.pattern.permute.xlu0 0
          %496 = vperm.xlu0 %495, %v478
          %v497 = vpop.permute.xlu0 %496
          %v499 = vsub.f32 %v317, %v482
          %v500 = vsub.f32 %v319, %v482
          %v501 = vsub.f32 %v321, %v487
          %v502 = vsub.f32 %v323, %v487
          %v503 = vsub.f32 %v327, %v492
          %v504 = vsub.f32 %v329, %v492
          %v505 = vsub.f32 %v331, %v497
          %v506 = vsub.f32 %v333, %v497
          %507 = vset.pattern.permute.xlu0 1
          %508 = vperm.xlu0 %507, %v475
          %v509 = vpop.permute.xlu0 %508
          %511 = vset.pattern.permute.xlu0 1
          %512 = vperm.xlu0 %511, %v476
          %v513 = vpop.permute.xlu0 %512
          %515 = vset.pattern.permute.xlu0 1
          %516 = vperm.xlu0 %515, %v477
          %v517 = vpop.permute.xlu0 %516
          %519 = vset.pattern.permute.xlu0 1
          %520 = vperm.xlu0 %519, %v478
          %v521 = vpop.permute.xlu0 %520
          %v523 = vmul.f32 %v499, %v509
          %v524 = vmul.f32 %v500, %v509
          %v525 = vmul.f32 %v501, %v513
          %v526 = vmul.f32 %v502, %v513
          %v527 = vmul.f32 %v503, %v517
          %v528 = vmul.f32 %v504, %v517
          %v529 = vmul.f32 %v505, %v521
          %v530 = vmul.f32 %v506, %v521
          %v531 = vld [vmem:[%s227] sm:$0xff]
          %v532 = vld [vmem:[%s227 + $0x8] sm:$0xff]
          %v533 = vld [vmem:[%s227 + $0x10] sm:$0xff]
          %v534 = vld [vmem:[%s227 + $0x18] sm:$0xff]
          %v535 = vld [vmem:[%s227 + $0x20] sm:$0xff]
          %v536 = vld [vmem:[%s227 + $0x28] sm:$0xff]
          %v537 = vld [vmem:[%s227 + $0x30] sm:$0xff]
          %v538 = vld [vmem:[%s227 + $0x38] sm:$0xff]
          %vm539 = vcmp.gt.f32.partialorder %v531, 0.0
          %vm540 = vcmp.gt.f32.partialorder %v532, 0.0
          %vm541 = vcmp.gt.f32.partialorder %v533, 0.0
          %vm542 = vcmp.gt.f32.partialorder %v534, 0.0
          %vm543 = vcmp.gt.f32.partialorder %v535, 0.0
          %vm544 = vcmp.gt.f32.partialorder %v536, 0.0
          %vm545 = vcmp.gt.f32.partialorder %v537, 0.0
          %vm546 = vcmp.gt.f32.partialorder %v538, 0.0
          %vm547 = vcmp.gt.f32.partialorder %v523, 0.0
          %vm548 = vcmp.gt.f32.partialorder %v524, 0.0
          %vm549 = vcmp.gt.f32.partialorder %v525, 0.0
          %vm550 = vcmp.gt.f32.partialorder %v526, 0.0
          %vm551 = vcmp.gt.f32.partialorder %v527, 0.0
          %vm552 = vcmp.gt.f32.partialorder %v528, 0.0
          %vm553 = vcmp.gt.f32.partialorder %v529, 0.0
          %vm554 = vcmp.gt.f32.partialorder %v530, 0.0
          %vm555 = vmxor %vm547, %vm539
          %vm556 = vmxor %vm548, %vm540
          %vm557 = vmxor %vm549, %vm541
          %vm558 = vmxor %vm550, %vm542
          %vm559 = vmxor %vm551, %vm543
          %vm560 = vmxor %vm552, %vm544
          %vm561 = vmxor %vm553, %vm545
          %vm562 = vmxor %vm554, %vm546
          %v563 = vsel %vm555, 1, 0
          %v564 = vsel %vm556, 1, 0
          %v565 = vsel %vm557, 1, 0
          %v566 = vsel %vm558, 1, 0
          %v567 = vsel %vm559, 1, 0
          %v568 = vsel %vm560, 1, 0
          %v569 = vsel %vm561, 1, 0
          %v570 = vsel %vm562, 1, 0
          %v571 = vcvt.s32.f32 %v563
          %v572 = vcvt.s32.f32 %v564
          %v573 = vcvt.s32.f32 %v565
          %v574 = vcvt.s32.f32 %v566
          %v575 = vcvt.s32.f32 %v567
          %v576 = vcvt.s32.f32 %v568
          %v577 = vcvt.s32.f32 %v569
          %v578 = vcvt.s32.f32 %v570
          %v579 = vadd.f32 %v523, 1.0
          %v580 = vadd.f32 %v524, 1.0
          %v581 = vadd.f32 %v525, 1.0
          %v582 = vadd.f32 %v526, 1.0
          %v583 = vadd.f32 %v527, 1.0
          %v584 = vadd.f32 %v528, 1.0
          %v585 = vadd.f32 %v529, 1.0
          %v586 = vadd.f32 %v530, 1.0
          %v587 = vmul.f32 %v579, %v579
          %v588 = vmul.f32 %v580, %v580
          %v589 = vmul.f32 %v581, %v581
          %v590 = vmul.f32 %v582, %v582
          %v591 = vmul.f32 %v583, %v583
          %v592 = vmul.f32 %v584, %v584
          %v593 = vmul.f32 %v585, %v585
          %v594 = vmul.f32 %v586, %v586
          %vm595 = vcmp.gt.f32.partialorder %v523, -1.0
          %vm596 = vcmp.gt.f32.partialorder %v524, -1.0
          %vm597 = vcmp.gt.f32.partialorder %v525, -1.0
          %vm598 = vcmp.gt.f32.partialorder %v526, -1.0
          %vm599 = vcmp.gt.f32.partialorder %v527, -1.0
          %vm600 = vcmp.gt.f32.partialorder %v528, -1.0
          %vm601 = vcmp.gt.f32.partialorder %v529, -1.0
          %vm602 = vcmp.gt.f32.partialorder %v530, -1.0
          %vm603 = vmxor %vm539, 1
          %vm604 = vmxor %vm540, 1
          %vm605 = vmxor %vm541, 1
          %vm606 = vmxor %vm542, 1
          %vm607 = vmxor %vm543, 1
          %vm608 = vmxor %vm544, 1
          %vm609 = vmxor %vm545, 1
          %vm610 = vmxor %vm546, 1
          %vm611 = vmand %vm595, %vm603
          %vm612 = vmand %vm596, %vm604
          %vm613 = vmand %vm597, %vm605
          %vm614 = vmand %vm598, %vm606
          %vm615 = vmand %vm599, %vm607
          %vm616 = vmand %vm600, %vm608
          %vm617 = vmand %vm601, %vm609
          %vm618 = vmand %vm602, %vm610
          %v619 = vsel %vm611, 1, 0
          %v620 = vsel %vm612, 1, 0
          %v621 = vsel %vm613, 1, 0
          %v622 = vsel %vm614, 1, 0
          %v623 = vsel %vm615, 1, 0
          %v624 = vsel %vm616, 1, 0
          %v625 = vsel %vm617, 1, 0
          %v626 = vsel %vm618, 1, 0
          %v627 = vcvt.s32.f32 %v619
          %v628 = vcvt.s32.f32 %v620
          %v629 = vcvt.s32.f32 %v621
          %v630 = vcvt.s32.f32 %v622
          %v631 = vcvt.s32.f32 %v623
          %v632 = vcvt.s32.f32 %v624
          %v633 = vcvt.s32.f32 %v625
          %v634 = vcvt.s32.f32 %v626
          %v635 = vmul.f32 %v587, %v627
          %v636 = vmul.f32 %v588, %v628
          %v637 = vmul.f32 %v589, %v629
          %v638 = vmul.f32 %v590, %v630
          %v639 = vmul.f32 %v591, %v631
          %v640 = vmul.f32 %v592, %v632
          %v641 = vmul.f32 %v593, %v633
          %v642 = vmul.f32 %v594, %v634
          %v643 = vsub.f32 %v523, 1.0
          %v644 = vsub.f32 %v524, 1.0
          %v645 = vsub.f32 %v525, 1.0
          %v646 = vsub.f32 %v526, 1.0
          %v647 = vsub.f32 %v527, 1.0
          %v648 = vsub.f32 %v528, 1.0
          %v649 = vsub.f32 %v529, 1.0
          %v650 = vsub.f32 %v530, 1.0
          %v651 = vmul.f32 %v643, %v643
          %v652 = vmul.f32 %v644, %v644
          %v653 = vmul.f32 %v645, %v645
          %v654 = vmul.f32 %v646, %v646
          %v655 = vmul.f32 %v647, %v647
          %v656 = vmul.f32 %v648, %v648
          %v657 = vmul.f32 %v649, %v649
          %v658 = vmul.f32 %v650, %v650
          %vm659 = vcmp.le.f32.partialorder %v523, 1.0
          %vm660 = vcmp.le.f32.partialorder %v524, 1.0
          %vm661 = vcmp.le.f32.partialorder %v525, 1.0
          %vm662 = vcmp.le.f32.partialorder %v526, 1.0
          %vm663 = vcmp.le.f32.partialorder %v527, 1.0
          %vm664 = vcmp.le.f32.partialorder %v528, 1.0
          %vm665 = vcmp.le.f32.partialorder %v529, 1.0
          %vm666 = vcmp.le.f32.partialorder %v530, 1.0
          %vm667 = vmand %vm659, %vm539
          %vm668 = vmand %vm660, %vm540
          %vm669 = vmand %vm661, %vm541
          %vm670 = vmand %vm662, %vm542
          %vm671 = vmand %vm663, %vm543
          %vm672 = vmand %vm664, %vm544
          %vm673 = vmand %vm665, %vm545
          %vm674 = vmand %vm666, %vm546
          %v675 = vsel %vm667, 1, 0
          %v676 = vsel %vm668, 1, 0
          %v677 = vsel %vm669, 1, 0
          %v678 = vsel %vm670, 1, 0
          %v679 = vsel %vm671, 1, 0
          %v680 = vsel %vm672, 1, 0
          %v681 = vsel %vm673, 1, 0
          %v682 = vsel %vm674, 1, 0
          %v683 = vcvt.s32.f32 %v675
          %v684 = vcvt.s32.f32 %v676
          %v685 = vcvt.s32.f32 %v677
          %v686 = vcvt.s32.f32 %v678
          %v687 = vcvt.s32.f32 %v679
          %v688 = vcvt.s32.f32 %v680
          %v689 = vcvt.s32.f32 %v681
          %v690 = vcvt.s32.f32 %v682
          %v691 = vmul.f32 %v651, %v683
          %v692 = vmul.f32 %v652, %v684
          %v693 = vmul.f32 %v653, %v685
          %v694 = vmul.f32 %v654, %v686
          %v695 = vmul.f32 %v655, %v687
          %v696 = vmul.f32 %v656, %v688
          %v697 = vmul.f32 %v657, %v689
          %v698 = vmul.f32 %v658, %v690
          %v699 = vadd.f32 %v635, %v691
          %v700 = vadd.f32 %v636, %v692
          %v701 = vadd.f32 %v637, %v693
          %v702 = vadd.f32 %v638, %v694
          %v703 = vadd.f32 %v639, %v695
          %v704 = vadd.f32 %v640, %v696
          %v705 = vadd.f32 %v641, %v697
          %v706 = vadd.f32 %v642, %v698
          %v707 = vld [vmem:[#allocation2] sm:$0xff]
          %v708 = vld [vmem:[#allocation2 + $0x8] sm:$0xff]
          %v709 = vld [vmem:[#allocation2 + $0x10] sm:$0xff]
          %v710 = vld [vmem:[#allocation2 + $0x18] sm:$0xff]
          %v711 = vadd.f32 %v571, %v572
          %v712 = vadd.f32 %v573, %v574
          %v713 = vadd.f32 %v575, %v576
          %v714 = vadd.f32 %v577, %v578
          %v715 = vadd.f32 %v707, %v711
          %v716 = vadd.f32 %v708, %v712
          %v717 = vadd.f32 %v709, %v713
          %v718 = vadd.f32 %v710, %v714
          %719 = vst [vmem:[#allocation2] sm:$0xff] %v715
          %720 = vst [vmem:[#allocation2 + $0x8] sm:$0xff] %v716
          %721 = vst [vmem:[#allocation2 + $0x10] sm:$0xff] %v717
          %722 = vst [vmem:[#allocation2 + $0x18] sm:$0xff] %v718
          %v723 = vld [vmem:[#allocation3] sm:$0xff]
          %v724 = vld [vmem:[#allocation3 + $0x8] sm:$0xff]
          %v725 = vld [vmem:[#allocation3 + $0x10] sm:$0xff]
          %v726 = vld [vmem:[#allocation3 + $0x18] sm:$0xff]
          %v727 = vadd.f32 %v699, %v700
          %v728 = vadd.f32 %v701, %v702
          %v729 = vadd.f32 %v703, %v704
          %v730 = vadd.f32 %v705, %v706
          %v731 = vadd.f32 %v723, %v727
          %v732 = vadd.f32 %v724, %v728
          %v733 = vadd.f32 %v725, %v729
          %v734 = vadd.f32 %v726, %v730
          %735 = vst [vmem:[#allocation3] sm:$0xff] %v731
          %736 = vst [vmem:[#allocation3 + $0x8] sm:$0xff] %v732
          %737 = vst [vmem:[#allocation3 + $0x10] sm:$0xff] %v733
          %738 = vst [vmem:[#allocation3 + $0x18] sm:$0xff] %v734
        $region56: #{tpu_custom_call.1} parent=31 // pred_fallthru
          _
        %p739 = scmp.eq.s32.totalorder %s27, 1
        %p740 = pnand %p395, %p739
        %p741 = pneg %p740
        %p742 = pnand %p741, %p339
        %p743 = pneg %p742
        // Predicated region
        $region57: #{tpu_custom_call.1} parent=31 // pred_check
          _
        $region58: #{tpu_custom_call.1} parent=31 // pred_check_branch
          %745 = sbr.rel (%p742) target = $region60
        $region59: #{tpu_custom_call.1} parent=31 // pred_region
          %v746 = vld [vmem:[#allocation2] sm:$0xff]
          %v747 = vld [vmem:[#allocation2 + $0x8] sm:$0xff]
          %v748 = vld [vmem:[#allocation2 + $0x10] sm:$0xff]
          %v749 = vld [vmem:[#allocation2 + $0x18] sm:$0xff]
          %v750 = vadd.f32 %v746, %v747
          %v751 = vadd.f32 %v750, %v748
          %v752 = vadd.f32 %v751, %v749
          %753 = vadd.xlane.f32.xlu0 %v752
          %v754 = vpop.xlane.xlu0 %753
          %v755 = vrot.slane %v754, 4
          %v756 = vadd.f32 %v754, %v755
          %v757 = vrot.slane %v756, 2
          %v758 = vadd.f32 %v756, %v757
          %v759 = vrot.slane %v758, 1
          %v760 = vadd.f32 %v758, %v759
          %s761 = vtos %v760
          %s762 = scalar_lea.smem [#allocation10], 0
          %763 = sst [smem:[%s762]] %s761
          %v764 = vld [vmem:[#allocation3] sm:$0xff]
          %v765 = vld [vmem:[#allocation3 + $0x8] sm:$0xff]
          %v766 = vld [vmem:[#allocation3 + $0x10] sm:$0xff]
          %v767 = vld [vmem:[#allocation3 + $0x18] sm:$0xff]
          %v768 = vadd.f32 %v764, %v765
          %v769 = vadd.f32 %v768, %v766
          %v770 = vadd.f32 %v769, %v767
          %771 = vadd.xlane.f32.xlu0 %v770
          %v772 = vpop.xlane.xlu0 %771
          %v773 = vrot.slane %v772, 4
          %v774 = vadd.f32 %v772, %v773
          %v775 = vrot.slane %v774, 2
          %v776 = vadd.f32 %v774, %v775
          %v777 = vrot.slane %v776, 1
          %v778 = vadd.f32 %v776, %v777
          %s779 = vtos %v778
          %s780 = scalar_lea.smem [#allocation10], 1
          %781 = sst [smem:[%s780]] %s779
        $region60: #{tpu_custom_call.1} parent=31 // pred_fallthru
          _
        // Predicated region
        $region61: #{tpu_custom_call.1} parent=31 // pred_check
          %p782 = pneg %p134
        $region62: #{tpu_custom_call.1} parent=31 // pred_check_branch
          %784 = sbr.rel (%p782) target = $region64
        $region63: #{tpu_custom_call.1} parent=31 // pred_region
          %s786 = ssub.s32 16, 16
          %787 = vsyncadd [#allocation7], %s786
          %790 = dma.smem_to_hbm [#allocation10], 16, %s3, [#allocation7]
        $region64: #{tpu_custom_call.1} parent=31 // pred_fallthru
          _
        // Predicated region
        $region65: #{tpu_custom_call.1} parent=31 // pred_check
          %p791 = pneg %p134
        $region66: #{tpu_custom_call.1} parent=31 // pred_check_branch
          %793 = sbr.rel (%p791) target = $region68
        $region67: #{tpu_custom_call.1} parent=31 // pred_region
          %794 = dma.done [#allocation7], 16
        $region68: #{tpu_custom_call.1} parent=31 // pred_fallthru
          _
        %795 = sfence
      $region32: #{tpu_custom_call.1} parent=5 // pred_fallthru
        _
      %p796 = scmp.le.s32.totalorder 2, %s16
      // Predicated region
      $region69: #{tpu_custom_call.1} parent=5 // pred_check
        %p797 = pneg %p796
      $region70: #{tpu_custom_call.1} parent=5 // pred_check_branch
        %799 = sbr.rel (%p797) target = $region72
      $region71: #{tpu_custom_call.1} parent=5 // pred_region
        %s800 = ssub.s32 %s16, 2
      $region72: #{tpu_custom_call.1} parent=5 // pred_fallthru
        _
    $region6: #{tpu_custom_call.1} parent=1 // loop_footer
      %s20 = sadd.s32 1, %s16
    $region7: #{tpu_custom_call.1} parent=1 // loop_footer_branch
      %15 = sbr.rel target = $region3
    $region8: #{tpu_custom_call.1} parent=1 // loop_exit
      _
    %801 = vsyncpa [#allocation6], 1
    %s802 = scalar_lea.sflag [#allocation6], 1
    %803 = vsyncpa %s802, 1
    %804 = vsyncpa [#allocation9], 1
    %s805 = scalar_lea.sflag [#allocation9], 1
    %806 = vsyncpa %s805, 1
    %807 = vsyncpa [#allocation7], 1
    %s808 = scalar_lea.sflag [#allocation7], 1
    %809 = vsyncpa %s808, 1

</llo_original>
